<compile_context>
chip_gen: v6e
topology: v6e:2x2x1
jax: 0.10.0
libtpu: 0.0.40
codegen_flags: <defaults>
</compile_context>

<pallas_src>
import jax
import jax.numpy as jnp
from jax.experimental import pallas as pl
from jax.experimental.pallas import tpu as pltpu

INPUT_DIM = 43   # hard-wired in the torch module
OUT_DIM = 10


def slp_kernel(x_ref, s_ref, b_ref, w_ref, bias_ref, out_ref):
    # Dropout(p=0.2) -> identity in eval mode.
    # Upcast (no-op for f32 input; enables bf16 activations from upstream).
    x = x_ref[...].astype(jnp.float32)
    # BatchNorm1d(43) folded to a per-feature affine (running stats), then ReLU.
    h = jnp.maximum(x * s_ref[...] + b_ref[...], 0.0)
    # Linear(43 -> 10) on the MXU with f32 accumulation.
    out_ref[...] = (
        jnp.dot(h, w_ref[...], preferred_element_type=jnp.float32)
        + bias_ref[...]
    )


def slp_forward(x, params, *, block_m=2048, small_batch=512):
    """x: (B, 43) float32 or bfloat16 -> (B, 10) float32.

    params: kernel-ready arrays from make_params():
      s (1,43), b (1,43), w_t (43,10), bias (1,10), all float32.
    """
    s, b, w_t, bias = params
    B, K = x.shape
    assert K == INPUT_DIM, "module is hard-wired to 43 input features"

    if B <= small_batch:
        # Small batch: one block covering the whole batch.  A block equal to
        # the full array dims is legal even when B is not a multiple of 8,
        # so no padding and no post-slice are needed.
        tm = B
    else:
        # Large batch: big tiles to amortize per-step overhead, capped so the
        # grid has >= 2 steps (keeps both v7x TensorCores busy).
        tm = min(block_m, pl.cdiv(pl.cdiv(B, 2), 8) * 8)
    grid = (pl.cdiv(B, tm),)

    return pl.pallas_call(
        slp_kernel,
        out_shape=jax.ShapeDtypeStruct((B, OUT_DIM), jnp.float32),
        grid=grid,
        in_specs=[
            pl.BlockSpec((tm, INPUT_DIM), lambda i: (i, 0)),        # x tile (pipelined)
            pl.BlockSpec((1, INPUT_DIM), lambda i: (0, 0)),         # BN scale (resident)
            pl.BlockSpec((1, INPUT_DIM), lambda i: (0, 0)),         # BN bias  (resident)
            pl.BlockSpec((INPUT_DIM, OUT_DIM), lambda i: (0, 0)),   # weight   (resident)
            pl.BlockSpec((1, OUT_DIM), lambda i: (0, 0)),           # linear bias
        ],
        out_specs=pl.BlockSpec((tm, OUT_DIM), lambda i: (i, 0)),
        compiler_params=pltpu.CompilerParams(
            dimension_semantics=("parallel",)),
    )(x, s, b, w_t, bias)


def make_params(key):
    """One-time parameter prep: BN fold + kernel-ready 2-D layouts.

    Matches the torch module shapes; returns (s(1,43), b(1,43), w_t(43,10),
    bias(1,10)), all float32, ready to pass straight into slp_forward.
    """
    eps = 1e-5
    ks = jax.random.split(key, 6)

    # BatchNorm1d(43): gamma, beta, running_mean, running_var
    gamma = 1.0 + 0.1 * jax.random.normal(ks[0], (INPUT_DIM,), jnp.float32)
    beta = 0.1 * jax.random.normal(ks[1], (INPUT_DIM,), jnp.float32)
    rmean = 0.1 * jax.random.normal(ks[2], (INPUT_DIM,), jnp.float32)
    rvar = jnp.abs(jax.random.normal(ks[3], (INPUT_DIM,), jnp.float32)) + 0.5

    # Fold BN into y = x * s + b (eval mode, running stats).
    s = gamma / jnp.sqrt(rvar + eps)
    b = beta - rmean * s

    # Linear(43, 10): torch weight is (10, 43); store transposed for x @ W.
    w = 0.05 * jax.random.normal(ks[4], (OUT_DIM, INPUT_DIM), jnp.float32)
    bias = 0.05 * jax.random.normal(ks[5], (OUT_DIM,), jnp.float32)

    return (s.reshape(1, INPUT_DIM),
            b.reshape(1, INPUT_DIM),
            w.T,
            bias.reshape(1, OUT_DIM))


def reference(x, params):
    s, b, w_t, bias = params
    h = x.astype(jnp.float32) * s + b   # dropout = identity in eval
    h = jnp.maximum(h, 0.0)
    return h @ w_t + bias


if __name__ == "__main__":
    key = jax.random.PRNGKey(0)
    kx, kp = jax.random.split(key)

    B = 8
    x = jax.random.normal(kx, (B, INPUT_DIM), jnp.float32)
    params = make_params(kp)

    out = slp_forward(x, params)
    out = jax.block_until_ready(out)

    ref = reference(x, params)
    assert out.shape == (B, OUT_DIM)
    assert jnp.allclose(out, ref, atol=1e-4, rtol=1e-4), "mismatch vs reference"

    print("KERNEL_OK")
</pallas_src>

<mosaic_0001>
module attributes {stable_mosaic.version = 11 : i64} {
  func.func @slp_kernel(%arg0: i32, %arg1: memref<8x43xf32, #tpu.memory_space<vmem>>, %arg2: memref<1x43xf32, #tpu.memory_space<vmem>>, %arg3: memref<1x43xf32, #tpu.memory_space<vmem>>, %arg4: memref<43x10xf32, #tpu.memory_space<vmem>>, %arg5: memref<1x10xf32, #tpu.memory_space<vmem>>, %arg6: memref<8x10xf32, #tpu.memory_space<vmem>>) attributes {dimension_semantics = [#tpu.dimension_semantics<parallel>], iteration_bounds = array<i64: 1>, scalar_prefetch = 0 : i64, scratch_operands = 0 : i64, tpu.core_type = #tpu.core_type<tc>, window_params = [{transform_indices = @transform_0, window_bounds = array<i64: 8, 43>}, {pipeline_mode = #tpu.pipeline_mode<synchronous>, transform_indices = @transform_1, window_bounds = array<i64: 1, 43>}, {pipeline_mode = #tpu.pipeline_mode<synchronous>, transform_indices = @transform_2, window_bounds = array<i64: 1, 43>}, {pipeline_mode = #tpu.pipeline_mode<synchronous>, transform_indices = @transform_3, window_bounds = array<i64: 43, 10>}, {pipeline_mode = #tpu.pipeline_mode<synchronous>, transform_indices = @transform_4, window_bounds = array<i64: 1, 10>}, {transform_indices = @transform_5, window_bounds = array<i64: 8, 10>}]} {
    %c0 = arith.constant 0 : index
    %c0_0 = arith.constant 0 : index
    %0 = vector.load %arg1[%c0, %c0_0] : memref<8x43xf32, #tpu.memory_space<vmem>>, vector<8x43xf32>
    %c0_1 = arith.constant 0 : index
    %c0_2 = arith.constant 0 : index
    %1 = vector.load %arg2[%c0_1, %c0_2] : memref<1x43xf32, #tpu.memory_space<vmem>>, vector<1x43xf32>
    %2 = vector.broadcast %1 : vector<1x43xf32> to vector<8x43xf32>
    %3 = arith.mulf %0, %2 : vector<8x43xf32>
    %c0_3 = arith.constant 0 : index
    %c0_4 = arith.constant 0 : index
    %4 = vector.load %arg3[%c0_3, %c0_4] : memref<1x43xf32, #tpu.memory_space<vmem>>, vector<1x43xf32>
    %5 = vector.broadcast %4 : vector<1x43xf32> to vector<8x43xf32>
    %6 = arith.addf %3, %5 : vector<8x43xf32>
    %cst = arith.constant 0.000000e+00 : f32
    %7 = vector.broadcast %cst : f32 to vector<8x43xf32>
    %8 = arith.maximumf %6, %7 : vector<8x43xf32>
    %c0_5 = arith.constant 0 : index
    %c0_6 = arith.constant 0 : index
    %9 = vector.load %arg4[%c0_5, %c0_6] : memref<43x10xf32, #tpu.memory_space<vmem>>, vector<43x10xf32>
    %cst_7 = arith.constant dense<0.000000e+00> : vector<8x10xf32>
    %10 = tpu.matmul %8, %9, %cst_7 {dimension_numbers = #tpu.dot_dimension_numbers<[1], [0], [0], [1], [0, 0, 1, 1], [], []>} : vector<8x43xf32>, vector<43x10xf32>, vector<8x10xf32> -> vector<8x10xf32>
    %c0_8 = arith.constant 0 : index
    %c0_9 = arith.constant 0 : index
    %11 = vector.load %arg5[%c0_8, %c0_9] : memref<1x10xf32, #tpu.memory_space<vmem>>, vector<1x10xf32>
    %12 = vector.broadcast %11 : vector<1x10xf32> to vector<8x10xf32>
    %13 = arith.addf %10, %12 : vector<8x10xf32>
    %c0_10 = arith.constant 0 : index
    %c0_11 = arith.constant 0 : index
    %14 = vector.load %arg6[%c0_10, %c0_11] : memref<8x10xf32, #tpu.memory_space<vmem>>, vector<8x10xf32>
    tpu.vector_store %arg6[%c0_10, %c0_11], %13 {strides = array<i32>} : memref<8x10xf32, #tpu.memory_space<vmem>>, vector<8x10xf32>,
    return
  }
  func.func @transform_0(%arg0: i32) -> (i32, i32) {
    %c0_i32 = arith.constant 0 : i32
    %c0_i32_0 = arith.constant 0 : i32
    return %arg0, %c0_i32 : i32, i32
  }
  func.func @transform_1(%arg0: i32) -> (i32, i32) {
    %c0_i32 = arith.constant 0 : i32
    %c0_i32_0 = arith.constant 0 : i32
    %c0_i32_1 = arith.constant 0 : i32
    return %c0_i32, %c0_i32_0 : i32, i32
  }
  func.func @transform_2(%arg0: i32) -> (i32, i32) {
    %c0_i32 = arith.constant 0 : i32
    %c0_i32_0 = arith.constant 0 : i32
    %c0_i32_1 = arith.constant 0 : i32
    return %c0_i32, %c0_i32_0 : i32, i32
  }
  func.func @transform_3(%arg0: i32) -> (i32, i32) {
    %c0_i32 = arith.constant 0 : i32
    %c0_i32_0 = arith.constant 0 : i32
    %c0_i32_1 = arith.constant 0 : i32
    return %c0_i32, %c0_i32_0 : i32, i32
  }
  func.func @transform_4(%arg0: i32) -> (i32, i32) {
    %c0_i32 = arith.constant 0 : i32
    %c0_i32_0 = arith.constant 0 : i32
    %c0_i32_1 = arith.constant 0 : i32
    return %c0_i32, %c0_i32_0 : i32, i32
  }
  func.func @transform_5(%arg0: i32) -> (i32, i32) {
    %c0_i32 = arith.constant 0 : i32
    %c0_i32_0 = arith.constant 0 : i32
    return %arg0, %c0_i32 : i32, i32
  }
}

</mosaic_0001>

<llo_original>
// kernel: tpu_custom_call.1
$region0: #{tpu_custom_call.1}
  #allocation0 [shape = 'u32[]', space=smem, size = 0x4, offset = 0x4, fixed_abs, tag = 'smem constant byte address 0x4 - core index']
  #allocation1 [shape = 'u32[144,128]{1,0:T(1,128)}', space=vmem, size = 0x12000, scoped, tag = 'internal scratch']
  %s0 = inlined_call_operand.vmem [shape: f32[8,43], index: 0, kind: input, shape index: {}]
  %s1 = inlined_call_operand.vmem [shape: f32[1,43], index: 1, kind: input, shape index: {}]
  %s2 = inlined_call_operand.vmem [shape: f32[1,43], index: 2, kind: input, shape index: {}]
  %s3 = inlined_call_operand.vmem [shape: f32[43,10], index: 3, kind: input, shape index: {}]
  %s4 = inlined_call_operand.vmem [shape: f32[1,10], index: 4, kind: input, shape index: {}]
  %s5 = inlined_call_operand.hbm [shape: f32[8,10], index: 5, kind: output, shape index: {}]
  %s6 = sld [smem:[#allocation0]]
  $region30: #{tpu_custom_call.1} parent=0
    _
  %s8 = ssub.s32 1, %s6
  %s9 = scalar_select 0, %s8, %s6
  $region1: #{tpu_custom_call.1} parent=0
    #allocation2 [shape = 'u8[4096]{0}', space=vmem, size = 0x1000, scoped, tag = 'output window, operand 0, single buffered']
    #allocation3 [shape = 's32[1]{0}', space=sflag, size = 0x4, scoped, tag = 'scoped memory for tpu_custom_call.1']
    %10 = vsyncpa [#allocation3], 0
    // Predicated region
    $region2: #{tpu_custom_call.1} parent=1 // pred_check
      _
    $region3: #{tpu_custom_call.1} parent=1 // pred_check_branch
      %12 = sbr.rel (0) target = $region5
    $region4: #{tpu_custom_call.1} parent=1 // pred_region
      _
    $region5: #{tpu_custom_call.1} parent=1 // pred_fallthru
      _
    // Predicated region
    $region6: #{tpu_custom_call.1} parent=1 // pred_check
      _
    $region7: #{tpu_custom_call.1} parent=1 // pred_check_branch
      %14 = sbr.rel (0) target = $region9
    $region8: #{tpu_custom_call.1} parent=1 // pred_region
      _
    $region9: #{tpu_custom_call.1} parent=1 // pred_fallthru
      _
    // Predicated region
    $region10: #{tpu_custom_call.1} parent=1 // pred_check
      _
    $region11: #{tpu_custom_call.1} parent=1 // pred_check_branch
      %16 = sbr.rel (0) target = $region13
    $region12: #{tpu_custom_call.1} parent=1 // pred_region
      _
    $region13: #{tpu_custom_call.1} parent=1 // pred_fallthru
      _
    // Predicated region
    $region14: #{tpu_custom_call.1} parent=1 // pred_check
      _
    $region15: #{tpu_custom_call.1} parent=1 // pred_check_branch
      %18 = sbr.rel (0) target = $region17
    $region16: #{tpu_custom_call.1} parent=1 // pred_region
      _
    $region17: #{tpu_custom_call.1} parent=1 // pred_fallthru
      _
    // Predicated region
    $region18: #{tpu_custom_call.1} parent=1 // pred_check
      _
    $region19: #{tpu_custom_call.1} parent=1 // pred_check_branch
      %20 = sbr.rel (0) target = $region21
    $region20: #{tpu_custom_call.1} parent=1 // pred_region
      _
    $region21: #{tpu_custom_call.1} parent=1 // pred_fallthru
      _
    %v21 = vld [vmem:[%s0] sm:$0xff]
    %v22 = vld [vmem:[%s1] sm:$0x1]
    %v24 = vlaneseq
    %v25 = vshrl.u32 %v24, 7
    %v26 = vsub.s32 0, %v25
    %v27 = vrot.slane %v22, %v26
    %v29 = vmul.f32 %v21, %v27
    %v30 = vld [vmem:[%s2] sm:$0x1]
    %v32 = vlaneseq
    %v33 = vshrl.u32 %v32, 7
    %v34 = vsub.s32 0, %v33
    %v35 = vrot.slane %v30, %v34
    %v37 = vadd.f32 %v29, %v35
    %v38 = vmax.f32 %v37, 0.0
    %v39 = vld [vmem:[%s3] sm:$0xff]
    %v40 = vld [vmem:[%s3 + $0x8] sm:$0xff]
    %v41 = vld [vmem:[%s3 + $0x10] sm:$0xff]
    %v42 = vld [vmem:[%s3 + $0x18] sm:$0xff]
    %v43 = vld [vmem:[%s3 + $0x20] sm:$0xff]
    %v44 = vld [vmem:[%s3 + $0x28] sm:$0x7]
    %v45 = vld [vmem:[%s4] sm:$0x1]
    %v47 = vlaneseq
    %v48 = vshrl.u32 %v47, 7
    %v49 = vsub.s32 0, %v48
    %v50 = vrot.slane %v45, %v49
    %vm52 = vcmask 351232
    %v54 = vsel %vm52, %v38, 0
    %vm56 = vcmask 1042432
    %v58 = vsel %vm56, %v44, 0
    %60 = vmatprep.subr.mxu0 0.0
    %61 = vmatpush1.msra.mxu0 0.0
    %62 = vmatprep.subr.mxu0 0.0
    %63 = vmatpush1.msra.mxu0 0.0
    %64 = vmatprep.subr.mxu0 0.0
    %65 = vmatpush1.msra.mxu0 0.0
    %66 = vmatprep.subr.mxu0 0.0
    %67 = vmatpush1.msra.mxu0 0.0
    %68 = vmatprep.subr.mxu0 0.0
    %69 = vmatpush1.msra.mxu0 0.0
    %70 = vmatprep.subr.mxu0 0.0
    %71 = vmatpush1.msra.mxu0 0.0
    %72 = vmatprep.subr.mxu0 0.0
    %73 = vmatpush1.msra.mxu0 0.0
    %74 = vmatprep.subr.mxu0 0.0
    %75 = vmatpush1.msra.mxu0 0.0
    %76 = vmatprep.subr.mxu0 0.0
    %77 = vmatpush1.msra.mxu0 0.0
    %78 = vmatprep.subr.mxu0 0.0
    %79 = vmatpush1.msra.mxu0 0.0
    %80 = vmatprep.subr.mxu0 0.0
    %81 = vmatpush1.msra.mxu0 %v58
    %82 = vmatprep.subr.mxu0 0.0
    %83 = vmatpush1.msra.mxu0 %v43
    %84 = vmatprep.subr.mxu0 0.0
    %85 = vmatpush1.msra.mxu0 %v42
    %86 = vmatprep.subr.mxu0 0.0
    %87 = vmatpush1.msra.mxu0 %v41
    %88 = vmatprep.subr.mxu0 0.0
    %89 = vmatpush1.msra.mxu0 %v40
    %90 = vmatprep.subr.mxu0 0.0
    %91 = vmatpush1.msra.mxu0 %v39
    %92 = vmatprep.subr.mxu0 0.0
    %93 = vmatpush2.msra.mxu0 0.0
    %94 = vmatprep.subr.mxu0 0.0
    %95 = vmatpush2.msra.mxu0 0.0
    %96 = vmatprep.subr.mxu0 0.0
    %97 = vmatpush2.msra.mxu0 0.0
    %98 = vmatprep.subr.mxu0 0.0
    %99 = vmatpush2.msra.mxu0 0.0
    %100 = vmatprep.subr.mxu0 0.0
    %101 = vmatpush2.msra.mxu0 0.0
    %102 = vmatprep.subr.mxu0 0.0
    %103 = vmatpush2.msra.mxu0 0.0
    %104 = vmatprep.subr.mxu0 0.0
    %105 = vmatpush2.msra.mxu0 0.0
    %106 = vmatprep.subr.mxu0 0.0
    %107 = vmatpush2.msra.mxu0 0.0
    %108 = vmatprep.subr.mxu0 0.0
    %109 = vmatpush2.msra.mxu0 0.0
    %110 = vmatprep.subr.mxu0 0.0
    %111 = vmatpush2.msra.mxu0 0.0
    %112 = vmatprep.subr.mxu0 0.0
    %113 = vmatpush2.msra.mxu0 0.0
    %114 = vmatprep.subr.mxu0 0.0
    %115 = vmatpush2.msra.mxu0 0.0
    %116 = vmatprep.subr.mxu0 0.0
    %117 = vmatpush2.msra.mxu0 0.0
    %118 = vmatprep.subr.mxu0 0.0
    %119 = vmatpush2.msra.mxu0 0.0
    %120 = vmatprep.subr.mxu0 0.0
    %121 = vmatpush2.msra.mxu0 0.0
    %122 = vmatprep.subr.mxu0 0.0
    %123 = vmatpush2.msra.mxu0 0.0
    %124 = vmatprep.mubr.f32.mxu0 0.0
    %125 = vmatmul.mubr.f32.gmra.mxu0 %v54
    %v126 = vpop.f32.mrf.mxu0
    %v127 = vadd.f32 %v50, %v126
    %v128 = vpop.f32.mrf.mxu0
    %129 = vdwg.mxu0
    %vm130 = vcmask 80896
    %131 = vst.msk [vmem:[#allocation2] sm:$0xff] %vm130, %v127
    // Predicated region
    $region22: #{tpu_custom_call.1} parent=1 // pred_check
      _
    $region23: #{tpu_custom_call.1} parent=1 // pred_check_branch
      %133 = sbr.rel (0) target = $region25
    $region24: #{tpu_custom_call.1} parent=1 // pred_region
      %s135 = ssub.s32 128, 128
      %136 = vsyncadd [#allocation3], %s135
      %s138 = sshll.u32 [#allocation2], 4
      %s139 = int_to_ptr.vmem [resolvable:$true] %s138
      %141 = dma.vmem_to_hbm [thread:$0]  %s139, 128, %s5, [#allocation3]
    $region25: #{tpu_custom_call.1} parent=1 // pred_fallthru
      _
    // Predicated region
    $region26: #{tpu_custom_call.1} parent=1 // pred_check
      _
    $region27: #{tpu_custom_call.1} parent=1 // pred_check_branch
      %143 = sbr.rel (0) target = $region29
    $region28: #{tpu_custom_call.1} parent=1 // pred_region
      %144 = dma.done [#allocation3], 128
    $region29: #{tpu_custom_call.1} parent=1 // pred_fallthru
      _
    %145 = vsyncpa [#allocation3], 1

</llo_original>
